<compile_context>
chip_gen: v5e
topology: v5e:2x2
jax: 0.10.0
libtpu: 0.0.40
codegen_flags: <defaults>
</compile_context>

<pallas_src>
import math

import jax
import jax.numpy as jnp
from jax.experimental import pallas as pl
from jax.experimental.pallas import tpu as pltpu


_TILE_TARGET_BYTES = 6 * 1024 * 1024   # per x tile (output tile is the same size)
_VMEM_LIMIT_BYTES = 48 * 1024 * 1024   # > 4x tile; under v7x's 64 MiB physical VMEM
_MIN_GRID_FOR_PARALLEL = 4             # give v7x's 2 TCs something to shard


# ---------------------------------------------------------------------------
# Kernel: y = (a*x + b)*x + c  (Horner), f32 internally, stored in x.dtype.
# ---------------------------------------------------------------------------
def _poly2_kernel(x_ref, a_ref, b_ref, c_ref, o_ref):
    x = x_ref[...].astype(jnp.float32)   # (TILE_R, LANE)
    a = a_ref[...]                       # (1, LANE) f32 -- broadcasts over rows
    b = b_ref[...]
    c = c_ref[...]
    o_ref[...] = ((a * x + b) * x + c).astype(o_ref.dtype)


def _pallas_poly2_2d(x2d, a_row, b_row, c_row, tile_r):
    """x2d: (rows, lane); params: (1, lane) f32.  Ragged rows handled by cdiv."""
    rows, lane = x2d.shape
    grid = pl.cdiv(rows, tile_r)
    return pl.pallas_call(
        _poly2_kernel,
        out_shape=jax.ShapeDtypeStruct((rows, lane), x2d.dtype),
        grid=(grid,),
        in_specs=[
            pl.BlockSpec((tile_r, lane), lambda i: (i, 0)),
            # constant block index -> a/b/c stay resident in VMEM (no re-DMA)
            pl.BlockSpec((1, lane), lambda i: (0, 0)),
            pl.BlockSpec((1, lane), lambda i: (0, 0)),
            pl.BlockSpec((1, lane), lambda i: (0, 0)),
        ],
        out_specs=pl.BlockSpec((tile_r, lane), lambda i: (i, 0)),
        compiler_params=pltpu.CompilerParams(
            dimension_semantics=("parallel",),
            vmem_limit_bytes=_VMEM_LIMIT_BYTES,
        ),
    )(x2d, a_row, b_row, c_row)


def _choose_tile_rows(rows, lane, itemsize):
    """Row-tile sized by bytes (~_TILE_TARGET_BYTES), multiple of 8, but keep
    >= _MIN_GRID_FOR_PARALLEL grid steps when there is enough work so that the
    ("parallel",) grid can be sharded over v7x's two TensorCores."""
    bytes_per_row = lane * itemsize
    tile_r = max(8, (_TILE_TARGET_BYTES // bytes_per_row) // 8 * 8)
    if (pl.cdiv(rows, tile_r) < _MIN_GRID_FOR_PARALLEL
            and rows >= _MIN_GRID_FOR_PARALLEL * 8):
        tile_r = max(8, (rows // _MIN_GRID_FOR_PARALLEL) // 8 * 8)
    if tile_r >= rows:
        tile_r = rows       # single block == full dim (legal for any row count)
    return tile_r


def _choose_lane(n, total, itemsize):
    """Lane-dense width: lcm(n, 128), optionally widened when that stays exact
    w.r.t. the flat length.  Returns None if even 8 rows blow the tile budget
    (then the (B, n) fallback path is used instead)."""
    lane = n * (128 // math.gcd(n, 128))          # lcm(n, 128)
    if lane * 8 * itemsize > _TILE_TARGET_BYTES:
        return None
    for k in (8, 4, 2):                           # optional widening (free win)
        cand = lane * k
        if (cand <= 4096 and cand * 8 * itemsize <= _TILE_TARGET_BYTES
                and total % cand == 0):
            return cand
    return lane


def poly2(x, a, b, c, *, use_pallas=None):
    """y = a*x^2 + b*x + c, per-neuron a/b/c broadcast over the last dim."""
    n = a.shape[0]
    assert x.shape[-1] == n, "last dim must equal neuro_nb"
    total = x.size
    dtype = x.dtype
    itemsize = jnp.dtype(dtype).itemsize

    a32 = a.astype(jnp.float32)
    b32 = b.astype(jnp.float32)
    c32 = c.astype(jnp.float32)

    # For tiny arrays, pallas_call launch overhead dwarfs the work.
    if use_pallas is None:
        use_pallas = total >= (1 << 15)
    if not use_pallas:
        return ((a32 * x + b32) * x + c32).astype(dtype)

    lane = _choose_lane(n, total, itemsize)

    if lane is not None:
        # --- Lane-dense flat path (exact: lane % n == 0) -------------------
        reps = lane // n
        a_row = jnp.tile(a32, reps).reshape(1, lane)
        b_row = jnp.tile(b32, reps).reshape(1, lane)
        c_row = jnp.tile(c32, reps).reshape(1, lane)

        flat = x.reshape(-1)            # free (contiguous row-major)
        rem = total % lane
        main = total - rem
        rows = main // lane

        parts = []
        if rows > 0:
            x2d = flat.reshape(rows, lane) if rem == 0 else flat[:main].reshape(rows, lane)
            tile_r = _choose_tile_rows(rows, lane, itemsize)
            y_main = _pallas_poly2_2d(x2d, a_row, b_row, c_row, tile_r)
            parts.append(y_main.reshape(-1))
        if rem > 0:
            # rem is a multiple of n (total % n == 0 and lane % n == 0), so the
            # tail (< lane elements) broadcasts cleanly; handle it in plain XLA.
            tail = flat[main:].reshape(-1, n)
            y_tail = ((a32 * tail + b32) * tail + c32).astype(dtype)
            parts.append(y_tail.reshape(-1))
        y_flat = parts[0] if len(parts) == 1 else jnp.concatenate(parts)
        return y_flat.reshape(x.shape)

    # --- Fallback: n too wide for a flat lane-dense view -------------------
    # (B, n) view with the block covering the full last dim (legal for any n);
    # no host-side lane padding -- Mosaic pads in VMEM only, masked vst at the
    # ragged lane edge is hidden in this memory-bound regime.
    B = total // n
    x2d = x.reshape(B, n)
    tile_b = _choose_tile_rows(B, n, itemsize)
    y2d = _pallas_poly2_2d(x2d, a32.reshape(1, n), b32.reshape(1, n),
                           c32.reshape(1, n), tile_b)
    return y2d.reshape(x.shape)


if __name__ == "__main__":
    key = jax.random.PRNGKey(0)
    k_x, k_a, k_b, k_c, k_x2, k_a3, k_b3, k_c3, k_x3 = jax.random.split(key, 9)

    neuro_nb = 32
    batch = 8

    a = jax.random.normal(k_a, (neuro_nb,), dtype=jnp.float32)
    b = jax.random.normal(k_b, (neuro_nb,), dtype=jnp.float32)
    c = jax.random.normal(k_c, (neuro_nb,), dtype=jnp.float32)
    x = jax.random.normal(k_x, (batch, neuro_nb), dtype=jnp.float32)

    # Force the Pallas path even at this tiny demo size.
    y = jax.block_until_ready(poly2(x, a, b, c, use_pallas=True))
    y_ref = a * (x * x) + b * x + c
    assert jnp.allclose(y, y_ref, atol=1e-5, rtol=1e-5), "mismatch vs reference (f32)"

    # Flat length not a multiple of the lane width -> kernel + XLA-tail path.
    x2 = jax.random.normal(k_x2, (10, neuro_nb), dtype=jnp.float32)
    y2 = jax.block_until_ready(poly2(x2, a, b, c, use_pallas=True))
    y2_ref = a * (x2 * x2) + b * x2 + c
    assert jnp.allclose(y2, y2_ref, atol=1e-5, rtol=1e-5), "mismatch vs reference (tail)"

    # Ragged last row-tile handled by the cdiv grid (no padding copies).
    n3 = 128
    a3 = jax.random.normal(k_a3, (n3,), dtype=jnp.float32)
    b3 = jax.random.normal(k_b3, (n3,), dtype=jnp.float32)
    c3 = jax.random.normal(k_c3, (n3,), dtype=jnp.float32)
    x3 = jax.random.normal(k_x3, (33, n3), dtype=jnp.float32)
    y3 = jax.block_until_ready(poly2(x3, a3, b3, c3, use_pallas=True))
    y3_ref = a3 * (x3 * x3) + b3 * x3 + c3
    assert jnp.allclose(y3, y3_ref, atol=1e-5, rtol=1e-5), "mismatch vs reference (ragged)"

    # bf16 inputs: kernel computes in f32 internally, casts result back.
    xb = x.astype(jnp.bfloat16)
    yb = jax.block_until_ready(poly2(xb, a, b, c, use_pallas=True))
    yb_ref = a * (xb * xb) + b * xb + c
    assert jnp.allclose(yb.astype(jnp.float32), yb_ref.astype(jnp.float32),
                        atol=5e-2, rtol=5e-2), "mismatch vs reference (bf16)"

    print("KERNEL_OK")
</pallas_src>

<mosaic_0001>
module attributes {stable_mosaic.version = 11 : i64} {
  func.func @_poly2_kernel(%arg0: i32, %arg1: memref<1x256xf32, #tpu.memory_space<vmem>>, %arg2: memref<1x256xf32, #tpu.memory_space<vmem>>, %arg3: memref<1x256xf32, #tpu.memory_space<vmem>>, %arg4: memref<1x256xf32, #tpu.memory_space<vmem>>, %arg5: memref<1x256xf32, #tpu.memory_space<vmem>>) attributes {dimension_semantics = [#tpu.dimension_semantics<parallel>], iteration_bounds = array<i64: 1>, scalar_prefetch = 0 : i64, scratch_operands = 0 : i64, tpu.core_type = #tpu.core_type<tc>, window_params = [{transform_indices = @transform_0, window_bounds = array<i64: 1, 256>}, {pipeline_mode = #tpu.pipeline_mode<synchronous>, transform_indices = @transform_1, window_bounds = array<i64: 1, 256>}, {pipeline_mode = #tpu.pipeline_mode<synchronous>, transform_indices = @transform_2, window_bounds = array<i64: 1, 256>}, {pipeline_mode = #tpu.pipeline_mode<synchronous>, transform_indices = @transform_3, window_bounds = array<i64: 1, 256>}, {transform_indices = @transform_4, window_bounds = array<i64: 1, 256>}]} {
    %c0 = arith.constant 0 : index
    %c0_0 = arith.constant 0 : index
    %0 = vector.load %arg1[%c0, %c0_0] : memref<1x256xf32, #tpu.memory_space<vmem>>, vector<1x256xf32>
    %c0_1 = arith.constant 0 : index
    %c0_2 = arith.constant 0 : index
    %1 = vector.load %arg2[%c0_1, %c0_2] : memref<1x256xf32, #tpu.memory_space<vmem>>, vector<1x256xf32>
    %c0_3 = arith.constant 0 : index
    %c0_4 = arith.constant 0 : index
    %2 = vector.load %arg3[%c0_3, %c0_4] : memref<1x256xf32, #tpu.memory_space<vmem>>, vector<1x256xf32>
    %c0_5 = arith.constant 0 : index
    %c0_6 = arith.constant 0 : index
    %3 = vector.load %arg4[%c0_5, %c0_6] : memref<1x256xf32, #tpu.memory_space<vmem>>, vector<1x256xf32>
    %4 = arith.mulf %1, %0 : vector<1x256xf32>
    %5 = arith.addf %4, %2 : vector<1x256xf32>
    %6 = arith.mulf %5, %0 : vector<1x256xf32>
    %7 = arith.addf %6, %3 : vector<1x256xf32>
    %c0_7 = arith.constant 0 : index
    %c0_8 = arith.constant 0 : index
    %8 = vector.load %arg5[%c0_7, %c0_8] : memref<1x256xf32, #tpu.memory_space<vmem>>, vector<1x256xf32>
    tpu.vector_store %arg5[%c0_7, %c0_8], %7 {strides = array<i32>} : memref<1x256xf32, #tpu.memory_space<vmem>>, vector<1x256xf32>,
    return
  }
  func.func @transform_0(%arg0: i32) -> (i32, i32) {
    %c0_i32 = arith.constant 0 : i32
    %c0_i32_0 = arith.constant 0 : i32
    return %arg0, %c0_i32 : i32, i32
  }
  func.func @transform_1(%arg0: i32) -> (i32, i32) {
    %c0_i32 = arith.constant 0 : i32
    %c0_i32_0 = arith.constant 0 : i32
    %c0_i32_1 = arith.constant 0 : i32
    return %c0_i32, %c0_i32_0 : i32, i32
  }
  func.func @transform_2(%arg0: i32) -> (i32, i32) {
    %c0_i32 = arith.constant 0 : i32
    %c0_i32_0 = arith.constant 0 : i32
    %c0_i32_1 = arith.constant 0 : i32
    return %c0_i32, %c0_i32_0 : i32, i32
  }
  func.func @transform_3(%arg0: i32) -> (i32, i32) {
    %c0_i32 = arith.constant 0 : i32
    %c0_i32_0 = arith.constant 0 : i32
    %c0_i32_1 = arith.constant 0 : i32
    return %c0_i32, %c0_i32_0 : i32, i32
  }
  func.func @transform_4(%arg0: i32) -> (i32, i32) {
    %c0_i32 = arith.constant 0 : i32
    %c0_i32_0 = arith.constant 0 : i32
    return %arg0, %c0_i32 : i32, i32
  }
}

</mosaic_0001>

<llo_original>
// kernel: tpu_custom_call.1
$region0: #{tpu_custom_call.1}
  #allocation0 [shape = 'u32[]', space=smem, size = 0x4, offset = 0x4, fixed_abs, tag = 'smem constant byte address 0x4 - core index']
  #allocation1 [shape = 'u32[72,128]{1,0:T(1,128)}', space=vmem, size = 0x9000, scoped, tag = 'internal scratch']
  %s0 = inlined_call_operand.hbm [shape: f32[1,256], index: 0, kind: input, shape index: {}]
  %s1 = inlined_call_operand.hbm [shape: f32[1,256], index: 1, kind: input, shape index: {}]
  %s2 = inlined_call_operand.hbm [shape: f32[1,256], index: 2, kind: input, shape index: {}]
  %s3 = inlined_call_operand.vmem [shape: f32[1,256], index: 3, kind: input, shape index: {}]
  %s4 = inlined_call_operand.hbm [shape: f32[1,256], index: 4, kind: output, shape index: {}]
  %s5 = sld [smem:[#allocation0]]
  $region38: #{tpu_custom_call.1} parent=0
    _
  %s7 = ssub.s32 1, %s5
  %s8 = scalar_select 0, %s7, %s5
  $region1: #{tpu_custom_call.1} parent=0
    #allocation2 [shape = 'u8[1024]{0}', space=vmem, size = 0x400, scoped, tag = 'input window, operand 0, single buffered']
    #allocation3 [shape = 's32[1]{0}', space=sflag, size = 0x4, scoped, tag = 'scoped memory for tpu_custom_call.1']
    #allocation4 [shape = 's32[1]{0}', space=sflag, size = 0x4, scoped, tag = 'scoped memory for tpu_custom_call.1']
    #allocation5 [shape = 'u8[1024]{0}', space=vmem, size = 0x400, scoped, tag = 'input window, operand 1, single buffered']
    #allocation6 [shape = 's32[1]{0}', space=sflag, size = 0x4, scoped, tag = 'scoped memory for tpu_custom_call.1']
    #allocation7 [shape = 'u8[1024]{0}', space=vmem, size = 0x400, scoped, tag = 'input window, operand 2, single buffered']
    #allocation8 [shape = 'u8[1024]{0}', space=vmem, size = 0x400, scoped, tag = 'output window, operand 0, single buffered']
    %9 = vsyncpa [#allocation3], 0
    %10 = vsyncpa [#allocation6], 0
    %11 = vsyncpa [#allocation4], 0
    // Predicated region
    $region2: #{tpu_custom_call.1} parent=1 // pred_check
      _
    $region3: #{tpu_custom_call.1} parent=1 // pred_check_branch
      %13 = sbr.rel (0) target = $region5
    $region4: #{tpu_custom_call.1} parent=1 // pred_region
      %15 = vsyncadd [#allocation3], 0
      %s17 = sshll.u32 %s0, 4
      %s18 = int_to_ptr.hbm [resolvable:$true] %s17
      %s19 = sshll.u32 [#allocation2], 4
      %s20 = int_to_ptr.vmem [resolvable:$true] %s19
      %22 = dma.hbm_to_vmem [thread:$0]  %s18, 32, %s20, [#allocation3]
    $region5: #{tpu_custom_call.1} parent=1 // pred_fallthru
      _
    // Predicated region
    $region6: #{tpu_custom_call.1} parent=1 // pred_check
      _
    $region7: #{tpu_custom_call.1} parent=1 // pred_check_branch
      %24 = sbr.rel (0) target = $region9
    $region8: #{tpu_custom_call.1} parent=1 // pred_region
      %26 = vsyncadd [#allocation6], 0
      %s28 = sshll.u32 %s1, 4
      %s29 = int_to_ptr.hbm [resolvable:$true] %s28
      %s30 = sshll.u32 [#allocation5], 4
      %s31 = int_to_ptr.vmem [resolvable:$true] %s30
      %33 = dma.hbm_to_vmem [thread:$0]  %s29, 32, %s31, [#allocation6]
    $region9: #{tpu_custom_call.1} parent=1 // pred_fallthru
      _
    // Predicated region
    $region10: #{tpu_custom_call.1} parent=1 // pred_check
      _
    $region11: #{tpu_custom_call.1} parent=1 // pred_check_branch
      %35 = sbr.rel (0) target = $region13
    $region12: #{tpu_custom_call.1} parent=1 // pred_region
      %37 = vsyncadd [#allocation6], 0
      %s39 = sshll.u32 %s2, 4
      %s40 = int_to_ptr.hbm [resolvable:$true] %s39
      %s41 = sshll.u32 [#allocation7], 4
      %s42 = int_to_ptr.vmem [resolvable:$true] %s41
      %44 = dma.hbm_to_vmem [thread:$0]  %s40, 32, %s42, [#allocation6]
    $region13: #{tpu_custom_call.1} parent=1 // pred_fallthru
      _
    // Predicated region
    $region14: #{tpu_custom_call.1} parent=1 // pred_check
      _
    $region15: #{tpu_custom_call.1} parent=1 // pred_check_branch
      %46 = sbr.rel (0) target = $region17
    $region16: #{tpu_custom_call.1} parent=1 // pred_region
      _
    $region17: #{tpu_custom_call.1} parent=1 // pred_fallthru
      _
    // Predicated region
    $region18: #{tpu_custom_call.1} parent=1 // pred_check
      _
    $region19: #{tpu_custom_call.1} parent=1 // pred_check_branch
      %48 = sbr.rel (0) target = $region21
    $region20: #{tpu_custom_call.1} parent=1 // pred_region
      %50 = dma.done [#allocation3], 32
    $region21: #{tpu_custom_call.1} parent=1 // pred_fallthru
      _
    // Predicated region
    $region22: #{tpu_custom_call.1} parent=1 // pred_check
      _
    $region23: #{tpu_custom_call.1} parent=1 // pred_check_branch
      %52 = sbr.rel (0) target = $region25
    $region24: #{tpu_custom_call.1} parent=1 // pred_region
      %54 = dma.done [#allocation6], 32
    $region25: #{tpu_custom_call.1} parent=1 // pred_fallthru
      _
    // Predicated region
    $region26: #{tpu_custom_call.1} parent=1 // pred_check
      _
    $region27: #{tpu_custom_call.1} parent=1 // pred_check_branch
      %56 = sbr.rel (0) target = $region29
    $region28: #{tpu_custom_call.1} parent=1 // pred_region
      %58 = dma.done [#allocation6], 32
    $region29: #{tpu_custom_call.1} parent=1 // pred_fallthru
      _
    %v59 = vld [vmem:[#allocation2] sm:$0x3]
    %v60 = vld [vmem:[#allocation5] sm:$0x3]
    %v61 = vld [vmem:[#allocation7] sm:$0x3]
    %v62 = vld [vmem:[%s3] sm:$0x3]
    %v63 = vmul.f32 %v60, %v59
    %v64 = vadd.f32 %v63, %v61
    %v65 = vmul.f32 %v64, %v59
    %v66 = vadd.f32 %v65, %v62
    %v67 = vlaneseq
    %vm68 = vcmp.ge.s32.totalorder %v67, 0
    %vm69 = vcmp.lt.s32.totalorder %v67, 256
    %vm70 = vmand %vm68, %vm69
    %71 = vst.msk [vmem:[#allocation8] sm:$0x3] %vm70, %v66
    // Predicated region
    $region30: #{tpu_custom_call.1} parent=1 // pred_check
      _
    $region31: #{tpu_custom_call.1} parent=1 // pred_check_branch
      %73 = sbr.rel (0) target = $region33
    $region32: #{tpu_custom_call.1} parent=1 // pred_region
      %75 = vsyncadd [#allocation4], 0
      %s77 = sshll.u32 [#allocation8], 4
      %s78 = int_to_ptr.vmem [resolvable:$true] %s77
      %s79 = sshll.u32 %s4, 4
      %s80 = int_to_ptr.hbm [resolvable:$true] %s79
      %82 = dma.vmem_to_hbm [thread:$0]  %s78, 32, %s80, [#allocation4]
    $region33: #{tpu_custom_call.1} parent=1 // pred_fallthru
      _
    // Predicated region
    $region34: #{tpu_custom_call.1} parent=1 // pred_check
      _
    $region35: #{tpu_custom_call.1} parent=1 // pred_check_branch
      %84 = sbr.rel (0) target = $region37
    $region36: #{tpu_custom_call.1} parent=1 // pred_region
      %86 = dma.done [#allocation4], 32
    $region37: #{tpu_custom_call.1} parent=1 // pred_fallthru
      _
    %87 = vsyncpa [#allocation3], 1
    %88 = vsyncpa [#allocation6], 1
    %89 = vsyncpa [#allocation4], 1

</llo_original>
